<compile_context>
chip_gen: v7x
topology: tpu7x:2x2x1
jax: 0.10.0
libtpu: 0.0.40
codegen_flags: <defaults>
</compile_context>

<pallas_src>
import functools

import jax
import jax.numpy as jnp
from jax import lax
from jax.experimental import pallas as pl
from jax.experimental.pallas import tpu as pltpu

K = 31          # avg_pool2d kernel size
PAD = 15        # avg_pool2d padding
INV_AREA = 1.0 / float(K * K)   # count_include_pad=True => divisor is always 31*31


def _weighted_dice_kernel(ah_ref, aw_ref, inp_ref, tgt_ref,
                          inter_ref, den_ref, *, gamma):
    p, h, w = tgt_ref.shape
    pool_dt = ah_ref.dtype

    # ---- 31x31 box "sum pool" as two banded-Toeplitz batched matmuls -------
    t_p = tgt_ref[...].astype(pool_dt)                      # (P, H, W)
    aw_b = jnp.broadcast_to(aw_ref[...], (p, w, w))         # (P, W, W)
    ah_b = jnp.broadcast_to(ah_ref[...], (p, h, h))         # (P, H, H)

    # W-pool: u[p,h,v] = sum_w t[p,h,w] * A_W[w,v]   (f32 accumulation)
    u = jnp.einsum('phw,pwv->phv', t_p, aw_b,
                   preferred_element_type=jnp.float32)      # (P, H, W)
    # Counts <= 31 are exact in bf16, so the cast loses nothing for 0/1 masks.
    u_p = u.astype(pool_dt)
    # H-pool: cnt[p,h,w] = sum_k A_H[h,k] * u[p,k,w]
    cnt = jnp.einsum('phk,pkw->phw', ah_b, u_p,
                     preferred_element_type=jnp.float32)    # (P, H, W)

    # ---- elementwise weight + per-chunk partial sums (f32 on the VPU) ------
    x = inp_ref[...].astype(jnp.float32)
    t = tgt_ref[...].astype(jnp.float32)
    weight = 1.0 + gamma * jnp.abs(cnt * INV_AREA - t)

    inter_p = jnp.sum(x * t * weight)          # intersection partial
    den_p = jnp.sum(weight * (x + t))          # == sum(x*w) + sum(t*w)

    # Lane-dense (8,128) partial-sum blocks; one block per grid step, so the
    # chunk axis carries no state and can be split across TensorCores.
    inter_ref[...] = jnp.full((8, 128), inter_p, dtype=jnp.float32)
    den_ref[...] = jnp.full((8, 128), den_p, dtype=jnp.float32)


def _band(m, dtype):
    """Banded (|i-j| <= 15) 0/1 Toeplitz matrix for the separable box pool."""
    idx = jnp.arange(m, dtype=jnp.int32)
    return (jnp.abs(idx[:, None] - idx[None, :]) <= PAD).astype(dtype)


def _choose_plane_batch(n_planes, h, w, itemsize):
    """Pick planes-per-grid-step P: fill the MXU M dim, stay inside VMEM."""
    # Per plane: 2 inputs x 2 pipeline buffers at input dtype, ~6 live f32
    # temporaries during compute, plus the broadcast A_H / A_W batch slices.
    per_plane = h * w * (4 * itemsize + 6 * 4) + (h * h + w * w) * 2
    budget = 24 * 1024 * 1024           # leave headroom under the 48 MiB limit
    p_cap = max(1, budget // max(per_plane, 1))
    p_fill = -(-1024 // h)              # aim for P*H ~ 1024 MXU rows per step
    return int(max(1, min(n_planes, p_cap, p_fill)))


def weighted_dice_loss(inp, tgt, eps=1.0, gamma=5.0, pool_dtype=jnp.bfloat16):
    """Pallas implementation of WeightedDiceLoss.forward (NCHW inputs).

    pool_dtype: dtype fed to the MXU for the pooling matmuls.  bfloat16 is
    exact for binary targets (0/1 band x 0/1 mask, f32 accumulation); pass
    jnp.float32 if `tgt` is a soft (non-binary) mask and full precision of
    the pooled term matters.
    """
    assert inp.shape == tgt.shape and inp.ndim == 4
    n, c, h, w = inp.shape
    n_planes = n * c
    itemsize = jnp.dtype(inp.dtype).itemsize

    # The loss is independent per (n, c) plane until the final global sums.
    inp3 = inp.reshape(n_planes, h, w)
    tgt3 = tgt.reshape(n_planes, h, w)

    p = _choose_plane_batch(n_planes, h, w, itemsize)
    n_chunks = pl.cdiv(n_planes, p)
    pad = n_chunks * p - n_planes
    if pad:
        # Zero planes have x = t = 0 -> weight contributes nothing to either
        # partial sum, so zero padding is exact.
        inp3 = jnp.pad(inp3, ((0, pad), (0, 0), (0, 0)))
        tgt3 = jnp.pad(tgt3, ((0, pad), (0, 0), (0, 0)))

    ah = _band(h, pool_dtype)   # (H, H)
    aw = _band(w, pool_dtype)   # (W, W)

    kernel = functools.partial(_weighted_dice_kernel, gamma=float(gamma))

    pool_itemsize = jnp.dtype(pool_dtype).itemsize
    flops = n_chunks * p * (2 * h * w * w + 2 * h * h * w + 10 * h * w)
    bytes_accessed = (2 * n_chunks * p * h * w * itemsize
                      + (h * h + w * w) * pool_itemsize
                      + 2 * n_chunks * 8 * 128 * 4)

    # TODO(synk): when W is far below 128 (as in the tiny test shape), lanes
    # are partially masked; a block-diagonal A_W over stacked planes would be
    # needed for full lane density and is not implemented here.
    inter_parts, den_parts = pl.pallas_call(
        kernel,
        out_shape=(jax.ShapeDtypeStruct((n_chunks, 8, 128), jnp.float32),
                   jax.ShapeDtypeStruct((n_chunks, 8, 128), jnp.float32)),
        grid_spec=pltpu.PrefetchScalarGridSpec(
            num_scalar_prefetch=0,
            grid=(n_chunks,),
            in_specs=[
                # Pooling matrices: constant block index -> fetched once.
                pl.BlockSpec((h, h), lambda i: (0, 0)),
                pl.BlockSpec((w, w), lambda i: (0, 0)),
                # P planes per grid step.
                pl.BlockSpec((p, h, w), lambda i: (i, 0, 0)),
                pl.BlockSpec((p, h, w), lambda i: (i, 0, 0)),
            ],
            out_specs=(
                pl.BlockSpec((None, 8, 128), lambda i: (i, 0, 0)),
                pl.BlockSpec((None, 8, 128), lambda i: (i, 0, 0)),
            ),
        ),
        compiler_params=pltpu.CompilerParams(
            # No cross-step state -> chunks are independent; lets Mosaic shard
            # the chunk axis across both TensorCores on v7x.
            dimension_semantics=("parallel",),
            vmem_limit_bytes=48 * 1024 * 1024,
        ),
        cost_estimate=pl.CostEstimate(flops=flops, transcendentals=0,
                                      bytes_accessed=int(bytes_accessed)),
    )(ah, aw, inp3, tgt3)

    inter = jnp.sum(inter_parts[:, 0, 0])
    den = jnp.sum(den_parts[:, 0, 0])
    return 1.0 - (2.0 * inter + eps) / (den + eps)


def _reference_loss(inp, tgt, eps=1.0, gamma=5.0):
    """Pure-JAX reference mirroring the PyTorch semantics."""
    pooled = lax.reduce_window(
        tgt.astype(jnp.float32), 0.0, lax.add,
        window_dimensions=(1, 1, K, K),
        window_strides=(1, 1, 1, 1),
        padding=((0, 0), (0, 0), (PAD, PAD), (PAD, PAD)),
    ) / float(K * K)
    weight = 1.0 + gamma * jnp.abs(pooled - tgt)
    intersection = jnp.sum(inp * tgt * weight)
    dice = (2.0 * intersection + eps) / (
        jnp.sum(inp * weight) + jnp.sum(tgt * weight) + eps)
    return 1.0 - dice


if __name__ == "__main__":
    key = jax.random.PRNGKey(0)
    k1, k2 = jax.random.split(key)

    N, C, H, W = 2, 4, 16, 16
    # input ~ predicted probabilities, target ~ binary mask (as in dice losses)
    inp = jax.nn.sigmoid(jax.random.normal(k1, (N, C, H, W), jnp.float32))
    tgt = (jax.random.uniform(k2, (N, C, H, W), jnp.float32) > 0.5).astype(jnp.float32)

    loss = jax.block_until_ready(weighted_dice_loss(inp, tgt, eps=1.0, gamma=5.0))
    ref = jax.block_until_ready(_reference_loss(inp, tgt, eps=1.0, gamma=5.0))

    assert jnp.allclose(loss, ref, rtol=1e-4, atol=1e-5), (loss, ref)
    print("KERNEL_OK")
</pallas_src>

<mosaic_0001>
module attributes {stable_mosaic.version = 11 : i64} {
  func.func @_weighted_dice_kernel(%arg0: i32, %arg1: memref<16x16xbf16, #tpu.memory_space<vmem>>, %arg2: memref<16x16xbf16, #tpu.memory_space<vmem>>, %arg3: memref<8x16x16xf32, #tpu.memory_space<vmem>>, %arg4: memref<8x16x16xf32, #tpu.memory_space<vmem>>, %arg5: memref<1x8x128xf32, #tpu.memory_space<vmem>>, %arg6: memref<1x8x128xf32, #tpu.memory_space<vmem>>) attributes {dimension_semantics = [#tpu.dimension_semantics<parallel>], iteration_bounds = array<i64: 1>, scalar_prefetch = 0 : i64, scratch_operands = 0 : i64, tpu.core_type = #tpu.core_type<tc>, window_params = [{pipeline_mode = #tpu.pipeline_mode<synchronous>, transform_indices = @transform_0, window_bounds = array<i64: 16, 16>}, {pipeline_mode = #tpu.pipeline_mode<synchronous>, transform_indices = @transform_1, window_bounds = array<i64: 16, 16>}, {transform_indices = @transform_2, window_bounds = array<i64: 8, 16, 16>}, {transform_indices = @transform_3, window_bounds = array<i64: 8, 16, 16>}, {transform_indices = @transform_4, window_bounds = array<i64: 1, 8, 128>}, {transform_indices = @transform_5, window_bounds = array<i64: 1, 8, 128>}]} {
    %c0 = arith.constant 0 : index
    %c0_0 = arith.constant 0 : index
    %c0_1 = arith.constant 0 : index
    %0 = vector.load %arg4[%c0, %c0_0, %c0_1] : memref<8x16x16xf32, #tpu.memory_space<vmem>>, vector<8x16x16xf32>
    %1 = arith.truncf %0 : vector<8x16x16xf32> to vector<8x16x16xbf16>
    %c0_2 = arith.constant 0 : index
    %c0_3 = arith.constant 0 : index
    %2 = vector.load %arg2[%c0_2, %c0_3] : memref<16x16xbf16, #tpu.memory_space<vmem>>, vector<16x16xbf16>
    %3 = vector.shape_cast %2 : vector<16x16xbf16> to vector<1x16x16xbf16>
    %4 = vector.broadcast %3 : vector<1x16x16xbf16> to vector<8x16x16xbf16>
    %c0_4 = arith.constant 0 : index
    %c0_5 = arith.constant 0 : index
    %5 = vector.load %arg1[%c0_4, %c0_5] : memref<16x16xbf16, #tpu.memory_space<vmem>>, vector<16x16xbf16>
    %6 = vector.shape_cast %5 : vector<16x16xbf16> to vector<1x16x16xbf16>
    %7 = vector.broadcast %6 : vector<1x16x16xbf16> to vector<8x16x16xbf16>
    "tpu.trace_start"() <{level = 10 : i32, message = "phw,pwv->phv"}> : () -> ()
    %cst = arith.constant dense<0.000000e+00> : vector<8x16x16xf32>
    %8 = tpu.matmul %1, %4, %cst {dimension_numbers = #tpu.dot_dimension_numbers<[2], [1], [1], [2], [0, 0, 0, 1, 1, 2], [0], [0]>} : vector<8x16x16xbf16>, vector<8x16x16xbf16>, vector<8x16x16xf32> -> vector<8x16x16xf32>
    "tpu.trace_stop"() : () -> ()
    %9 = arith.truncf %8 : vector<8x16x16xf32> to vector<8x16x16xbf16>
    "tpu.trace_start"() <{level = 10 : i32, message = "phk,pkw->phw"}> : () -> ()
    %cst_6 = arith.constant dense<0.000000e+00> : vector<8x16x16xf32>
    %10 = tpu.matmul %7, %9, %cst_6 {dimension_numbers = #tpu.dot_dimension_numbers<[2], [1], [1], [2], [0, 0, 0, 1, 1, 2], [0], [0]>} : vector<8x16x16xbf16>, vector<8x16x16xbf16>, vector<8x16x16xf32> -> vector<8x16x16xf32>
    "tpu.trace_stop"() : () -> ()
    %c0_7 = arith.constant 0 : index
    %c0_8 = arith.constant 0 : index
    %c0_9 = arith.constant 0 : index
    %11 = vector.load %arg3[%c0_7, %c0_8, %c0_9] : memref<8x16x16xf32, #tpu.memory_space<vmem>>, vector<8x16x16xf32>
    %c0_10 = arith.constant 0 : index
    %c0_11 = arith.constant 0 : index
    %c0_12 = arith.constant 0 : index
    %12 = vector.load %arg4[%c0_10, %c0_11, %c0_12] : memref<8x16x16xf32, #tpu.memory_space<vmem>>, vector<8x16x16xf32>
    %cst_13 = arith.constant 0.00104058278 : f32
    %13 = vector.broadcast %cst_13 : f32 to vector<8x16x16xf32>
    %14 = arith.mulf %10, %13 : vector<8x16x16xf32>
    %15 = arith.subf %14, %12 : vector<8x16x16xf32>
    %16 = math.absf %15 : vector<8x16x16xf32>
    %cst_14 = arith.constant 5.000000e+00 : f32
    %17 = vector.broadcast %cst_14 : f32 to vector<8x16x16xf32>
    %18 = arith.mulf %17, %16 : vector<8x16x16xf32>
    %cst_15 = arith.constant 1.000000e+00 : f32
    %19 = vector.broadcast %cst_15 : f32 to vector<8x16x16xf32>
    %20 = arith.addf %19, %18 : vector<8x16x16xf32>
    %21 = arith.mulf %11, %12 : vector<8x16x16xf32>
    %22 = arith.mulf %21, %20 : vector<8x16x16xf32>
    %23 = vector.shape_cast %22 : vector<8x16x16xf32> to vector<1x8x16x16xf32>
    %cst_16 = arith.constant dense<0.000000e+00> : vector<1xf32>
    %24 = vector.multi_reduction <add>, %23, %cst_16 [1, 2, 3] : vector<1x8x16x16xf32> to vector<1xf32>
    %25 = vector.shape_cast %24 : vector<1xf32> to vector<1x1x1x1xf32>
    %26 = vector.extract %25[0, 0, 0, 0] : f32 from vector<1x1x1x1xf32>
    %27 = arith.addf %11, %12 : vector<8x16x16xf32>
    %28 = arith.mulf %20, %27 : vector<8x16x16xf32>
    %29 = vector.shape_cast %28 : vector<8x16x16xf32> to vector<1x8x16x16xf32>
    %cst_17 = arith.constant dense<0.000000e+00> : vector<1xf32>
    %30 = vector.multi_reduction <add>, %29, %cst_17 [1, 2, 3] : vector<1x8x16x16xf32> to vector<1xf32>
    %31 = vector.shape_cast %30 : vector<1xf32> to vector<1x1x1x1xf32>
    %32 = vector.extract %31[0, 0, 0, 0] : f32 from vector<1x1x1x1xf32>
    %33 = vector.broadcast %26 : f32 to vector<8x128xf32>
    %c0_18 = arith.constant 0 : index
    %c0_19 = arith.constant 0 : index
    %c0_20 = arith.constant 0 : index
    %34 = vector.load %arg5[%c0_18, %c0_19, %c0_20] : memref<1x8x128xf32, #tpu.memory_space<vmem>>, vector<1x8x128xf32>
    %35 = vector.shape_cast %34 : vector<1x8x128xf32> to vector<8x128xf32>
    %36 = vector.shape_cast %33 : vector<8x128xf32> to vector<1x8x128xf32>
    tpu.vector_store %arg5[%c0_18, %c0_19, %c0_20], %36 {strides = array<i32>} : memref<1x8x128xf32, #tpu.memory_space<vmem>>, vector<1x8x128xf32>,
    %37 = vector.broadcast %32 : f32 to vector<8x128xf32>
    %c0_21 = arith.constant 0 : index
    %c0_22 = arith.constant 0 : index
    %c0_23 = arith.constant 0 : index
    %38 = vector.load %arg6[%c0_21, %c0_22, %c0_23] : memref<1x8x128xf32, #tpu.memory_space<vmem>>, vector<1x8x128xf32>
    %39 = vector.shape_cast %38 : vector<1x8x128xf32> to vector<8x128xf32>
    %40 = vector.shape_cast %37 : vector<8x128xf32> to vector<1x8x128xf32>
    tpu.vector_store %arg6[%c0_21, %c0_22, %c0_23], %40 {strides = array<i32>} : memref<1x8x128xf32, #tpu.memory_space<vmem>>, vector<1x8x128xf32>,
    return
  }
  func.func @transform_0(%arg0: i32) -> (i32, i32) {
    %c0_i32 = arith.constant 0 : i32
    %c0_i32_0 = arith.constant 0 : i32
    %c0_i32_1 = arith.constant 0 : i32
    return %c0_i32, %c0_i32_0 : i32, i32
  }
  func.func @transform_1(%arg0: i32) -> (i32, i32) {
    %c0_i32 = arith.constant 0 : i32
    %c0_i32_0 = arith.constant 0 : i32
    %c0_i32_1 = arith.constant 0 : i32
    return %c0_i32, %c0_i32_0 : i32, i32
  }
  func.func @transform_2(%arg0: i32) -> (i32, i32, i32) {
    %c0_i32 = arith.constant 0 : i32
    %c0_i32_0 = arith.constant 0 : i32
    %c0_i32_1 = arith.constant 0 : i32
    return %arg0, %c0_i32, %c0_i32_0 : i32, i32, i32
  }
  func.func @transform_3(%arg0: i32) -> (i32, i32, i32) {
    %c0_i32 = arith.constant 0 : i32
    %c0_i32_0 = arith.constant 0 : i32
    %c0_i32_1 = arith.constant 0 : i32
    return %arg0, %c0_i32, %c0_i32_0 : i32, i32, i32
  }
  func.func @transform_4(%arg0: i32) -> (i32, i32, i32) {
    %c0_i32 = arith.constant 0 : i32
    %c0_i32_0 = arith.constant 0 : i32
    %c0_i32_1 = arith.constant 0 : i32
    return %arg0, %c0_i32, %c0_i32_0 : i32, i32, i32
  }
  func.func @transform_5(%arg0: i32) -> (i32, i32, i32) {
    %c0_i32 = arith.constant 0 : i32
    %c0_i32_0 = arith.constant 0 : i32
    %c0_i32_1 = arith.constant 0 : i32
    return %arg0, %c0_i32, %c0_i32_0 : i32, i32, i32
  }
}

</mosaic_0001>

<llo_original>
// kernel: tpu_custom_call.1
$region0: #{tpu_custom_call.1}
  #allocation0 [shape = 'u32[]', space=smem, size = 0x4, offset = 0x4, fixed_abs, tag = 'smem constant byte address 0x4 - core index']
  #allocation1 [shape = 'u32[144,128]{1,0:T(1,128)}', space=vmem, size = 0x12000, scoped, tag = 'internal scratch']
  %s0 = inlined_call_operand.hbm [shape: bf16[16,16], index: 0, kind: input, shape index: {}]
  %s1 = inlined_call_operand.hbm [shape: bf16[16,16], index: 1, kind: input, shape index: {}]
  %s2 = inlined_call_operand.hbm [shape: f32[8,16,16], index: 2, kind: input, shape index: {}]
  %s3 = inlined_call_operand.hbm [shape: f32[8,16,16], index: 3, kind: input, shape index: {}]
  %s4 = inlined_call_operand.hbm [shape: f32[1,8,128], index: 4, kind: output, shape index: {0}]
  %s5 = inlined_call_operand.hbm [shape: f32[1,8,128], index: 5, kind: output, shape index: {1}]
  %6 = xla_tuple %s4, %s5
  %s7 = sld [smem:[#allocation0]]
  $region50: #{tpu_custom_call.1} parent=0
    _
  %s9 = ssub.s32 1, %s7
  %s10 = scalar_select 0, %s9, %s7
  $region1: #{tpu_custom_call.1} parent=0
    #allocation2 [shape = 'u8[4096]{0}', space=vmem, size = 0x1000, scoped, tag = 'input window, operand 0, single buffered']
    #allocation3 [shape = 's32[1]{0}', space=sflag, size = 0x4, scoped, tag = 'scoped memory for tpu_custom_call.1']
    #allocation4 [shape = 's32[1]{0}', space=sflag, size = 0x4, scoped, tag = 'scoped memory for tpu_custom_call.1']
    #allocation5 [shape = 'u8[4096]{0}', space=vmem, size = 0x1000, scoped, tag = 'input window, operand 1, single buffered']
    #allocation6 [shape = 's32[1]{0}', space=sflag, size = 0x4, scoped, tag = 'scoped memory for tpu_custom_call.1']
    #allocation7 [shape = 'u8[65536]{0}', space=vmem, size = 0x10000, scoped, tag = 'input window, operand 2, single buffered']
    #allocation8 [shape = 'u8[65536]{0}', space=vmem, size = 0x10000, scoped, tag = 'input window, operand 3, single buffered']
    #allocation9 [shape = 's32[1]{0}', space=sflag, size = 0x4, scoped, tag = 'scoped memory for tpu_custom_call.1']
    #allocation10 [shape = 'u8[4096]{0}', space=vmem, size = 0x1000, scoped, tag = 'output window, operand 0, single buffered']
    #allocation11 [shape = 'u8[4096]{0}', space=vmem, size = 0x1000, scoped, tag = 'output window, operand 1, single buffered']
    #allocation12 [shape = 's32[1]{0}', space=sflag, size = 0x4, scoped, tag = 'scoped memory for tpu_custom_call.1']
    %11 = vsyncpa [#allocation3], 0
    %12 = vsyncpa [#allocation6], 0
    %13 = vsyncpa [#allocation9], 0
    %14 = vsyncpa [#allocation4], 0
    %15 = vsyncpa [#allocation12], 0
    // Predicated region
    $region2: #{tpu_custom_call.1} parent=1 // pred_check
      _
    $region3: #{tpu_custom_call.1} parent=1 // pred_check_branch
      %17 = sbr.rel (0) target = $region5
    $region4: #{tpu_custom_call.1} parent=1 // pred_region
      %s19 = ssub.s32 128, 128
      %20 = vsyncadd [#allocation3], %s19
      %s21 = sshll.u32 [#allocation2], 4
      %s22 = int_to_ptr.vmem [resolvable:$true] %s21
      %27 = dma.hbm_to_vmem [thread:$0]  %s0, 128, %s22, [#allocation3], 64, 64, 4
    $region5: #{tpu_custom_call.1} parent=1 // pred_fallthru
      _
    // Predicated region
    $region6: #{tpu_custom_call.1} parent=1 // pred_check
      _
    $region7: #{tpu_custom_call.1} parent=1 // pred_check_branch
      %29 = sbr.rel (0) target = $region9
    $region8: #{tpu_custom_call.1} parent=1 // pred_region
      %s31 = ssub.s32 128, 128
      %32 = vsyncadd [#allocation6], %s31
      %s33 = sshll.u32 [#allocation5], 4
      %s34 = int_to_ptr.vmem [resolvable:$true] %s33
      %39 = dma.hbm_to_vmem [thread:$0]  %s1, 128, %s34, [#allocation6], 64, 64, 4
    $region9: #{tpu_custom_call.1} parent=1 // pred_fallthru
      _
    // Predicated region
    $region10: #{tpu_custom_call.1} parent=1 // pred_check
      _
    $region11: #{tpu_custom_call.1} parent=1 // pred_check_branch
      %41 = sbr.rel (0) target = $region13
    $region12: #{tpu_custom_call.1} parent=1 // pred_region
      %s43 = ssub.s32 2048, 2048
      %44 = vsyncadd [#allocation6], %s43
      %s45 = sshll.u32 [#allocation7], 4
      %s46 = int_to_ptr.vmem [resolvable:$true] %s45
      %51 = dma.hbm_to_vmem [thread:$0]  %s2, 2048, %s46, [#allocation6], 128, 128, 8
    $region13: #{tpu_custom_call.1} parent=1 // pred_fallthru
      _
    // Predicated region
    $region14: #{tpu_custom_call.1} parent=1 // pred_check
      _
    $region15: #{tpu_custom_call.1} parent=1 // pred_check_branch
      %53 = sbr.rel (0) target = $region17
    $region16: #{tpu_custom_call.1} parent=1 // pred_region
      %s55 = ssub.s32 2048, 2048
      %56 = vsyncadd [#allocation9], %s55
      %s57 = sshll.u32 [#allocation8], 4
      %s58 = int_to_ptr.vmem [resolvable:$true] %s57
      %63 = dma.hbm_to_vmem [thread:$0]  %s3, 2048, %s58, [#allocation9], 128, 128, 8
    $region17: #{tpu_custom_call.1} parent=1 // pred_fallthru
      _
    // Predicated region
    $region18: #{tpu_custom_call.1} parent=1 // pred_check
      _
    $region19: #{tpu_custom_call.1} parent=1 // pred_check_branch
      %65 = sbr.rel (0) target = $region21
    $region20: #{tpu_custom_call.1} parent=1 // pred_region
      %66 = dma.done [#allocation3], 128
    $region21: #{tpu_custom_call.1} parent=1 // pred_fallthru
      _
    // Predicated region
    $region22: #{tpu_custom_call.1} parent=1 // pred_check
      _
    $region23: #{tpu_custom_call.1} parent=1 // pred_check_branch
      %68 = sbr.rel (0) target = $region25
    $region24: #{tpu_custom_call.1} parent=1 // pred_region
      %69 = dma.done [#allocation6], 128
    $region25: #{tpu_custom_call.1} parent=1 // pred_fallthru
      _
    // Predicated region
    $region26: #{tpu_custom_call.1} parent=1 // pred_check
      _
    $region27: #{tpu_custom_call.1} parent=1 // pred_check_branch
      %71 = sbr.rel (0) target = $region29
    $region28: #{tpu_custom_call.1} parent=1 // pred_region
      %72 = dma.done [#allocation6], 2048
    $region29: #{tpu_custom_call.1} parent=1 // pred_fallthru
      _
    // Predicated region
    $region30: #{tpu_custom_call.1} parent=1 // pred_check
      _
    $region31: #{tpu_custom_call.1} parent=1 // pred_check_branch
      %74 = sbr.rel (0) target = $region33
    $region32: #{tpu_custom_call.1} parent=1 // pred_region
      %75 = dma.done [#allocation9], 2048
    $region33: #{tpu_custom_call.1} parent=1 // pred_fallthru
      _
    %v77 = vld [vmem:[#allocation8] sm:$0xff]
    %v78 = vld [vmem:[#allocation8 + $0x8] sm:$0xff]
    %v79 = vld [vmem:[#allocation8 + $0x10] sm:$0xff]
    %v80 = vld [vmem:[#allocation8 + $0x18] sm:$0xff]
    %v81 = vld [vmem:[#allocation8 + $0x20] sm:$0xff]
    %v82 = vld [vmem:[#allocation8 + $0x28] sm:$0xff]
    %v83 = vld [vmem:[#allocation8 + $0x30] sm:$0xff]
    %v84 = vld [vmem:[#allocation8 + $0x38] sm:$0xff]
    %v85 = vld [vmem:[#allocation8 + $0x40] sm:$0xff]
    %v86 = vld [vmem:[#allocation8 + $0x48] sm:$0xff]
    %v87 = vld [vmem:[#allocation8 + $0x50] sm:$0xff]
    %v88 = vld [vmem:[#allocation8 + $0x58] sm:$0xff]
    %v89 = vld [vmem:[#allocation8 + $0x60] sm:$0xff]
    %v90 = vld [vmem:[#allocation8 + $0x68] sm:$0xff]
    %v91 = vld [vmem:[#allocation8 + $0x70] sm:$0xff]
    %v92 = vld [vmem:[#allocation8 + $0x78] sm:$0xff]
    %v93 = vpack.c.bf16 %v78, %v77
    %v94 = vpack.c.bf16 %v80, %v79
    %v95 = vpack.c.bf16 %v82, %v81
    %v96 = vpack.c.bf16 %v84, %v83
    %v97 = vpack.c.bf16 %v86, %v85
    %v98 = vpack.c.bf16 %v88, %v87
    %v99 = vpack.c.bf16 %v90, %v89
    %v100 = vpack.c.bf16 %v92, %v91
    %v101 = vld [vmem:[#allocation5] sm:$0xf]
    %v102 = vld [vmem:[#allocation5 + $0x4] sm:$0xf]
    %v103 = vld [vmem:[#allocation2] sm:$0xf]
    %v104 = vld [vmem:[#allocation2 + $0x4] sm:$0xf]
    %v107 = vunpack.c.l.b16 %v101
    %v108 = vunpack.c.l.b16 %v102
    %v109 = vpack.c.b16 %v108, %v107
    %vm111 = vcmask 130048
    %v113 = vsel %vm111, %v93, 0
    %115 = vmatprep.subr.bf16.mxu0 0
    %116 = vmatpush1.bf16.msra.mxu0 %v109
    %117 = vmatprep.subr.bf16.mxu0 0
    %118 = vmatpush1.bf16.msra.mxu0 0
    %119 = vmatprep.subr.bf16.mxu0 0
    %120 = vmatpush1.bf16.msra.mxu0 0
    %121 = vmatprep.subr.bf16.mxu0 0
    %122 = vmatpush1.bf16.msra.mxu0 0
    %123 = vmatprep.subr.bf16.mxu0 0
    %124 = vmatpush1.bf16.msra.mxu0 0
    %125 = vmatprep.subr.bf16.mxu0 0
    %126 = vmatpush1.bf16.msra.mxu0 0
    %127 = vmatprep.subr.bf16.mxu0 0
    %128 = vmatpush1.bf16.msra.mxu0 0
    %129 = vmatprep.subr.bf16.mxu0 0
    %130 = vmatpush1.bf16.msra.mxu0 0
    %131 = vmatprep.subr.bf16.mxu0 0
    %132 = vmatpush1.bf16.msra.mxu0 0
    %133 = vmatprep.subr.bf16.mxu0 0
    %134 = vmatpush1.bf16.msra.mxu0 0
    %135 = vmatprep.subr.bf16.mxu0 0
    %136 = vmatpush1.bf16.msra.mxu0 0
    %137 = vmatprep.subr.bf16.mxu0 0
    %138 = vmatpush1.bf16.msra.mxu0 0
    %139 = vmatprep.subr.bf16.mxu0 0
    %140 = vmatpush1.bf16.msra.mxu0 0
    %141 = vmatprep.subr.bf16.mxu0 0
    %142 = vmatpush1.bf16.msra.mxu0 0
    %143 = vmatprep.subr.bf16.mxu0 0
    %144 = vmatpush1.bf16.msra.mxu0 0
    %145 = vmatprep.subr.bf16.mxu0 0
    %146 = vmatpush1.bf16.msra.mxu0 0
    %147 = vmatprep.mubr.bf16.mxu0 0
    %148 = vmatmul.mubr.bf16.gmra.mrb[0].mxu0 %v113
    %v149 = vpop.f32.mrb[0].mxu0
    %v150 = vadd.f32 0.0, %v149
    %v151 = vpop.f32.mrb[0].mxu0
    %v152 = vpop.f32.mrb[0].mxu0
    %v153 = vadd.f32 0.0, %v152
    %v154 = vpop.f32.mrb[0].mxu0
    %155 = vdwg.mxu0
    %v157 = vsel %vm111, %v94, 0
    %159 = vmatprep.subr.bf16.mxu0 0
    %160 = vmatpush1.bf16.msra.mxu0 %v109
    %161 = vmatprep.subr.bf16.mxu0 0
    %162 = vmatpush1.bf16.msra.mxu0 0
    %163 = vmatprep.subr.bf16.mxu0 0
    %164 = vmatpush1.bf16.msra.mxu0 0
    %165 = vmatprep.subr.bf16.mxu0 0
    %166 = vmatpush1.bf16.msra.mxu0 0
    %167 = vmatprep.subr.bf16.mxu0 0
    %168 = vmatpush1.bf16.msra.mxu0 0
    %169 = vmatprep.subr.bf16.mxu0 0
    %170 = vmatpush1.bf16.msra.mxu0 0
    %171 = vmatprep.subr.bf16.mxu0 0
    %172 = vmatpush1.bf16.msra.mxu0 0
    %173 = vmatprep.subr.bf16.mxu0 0
    %174 = vmatpush1.bf16.msra.mxu0 0
    %175 = vmatprep.subr.bf16.mxu0 0
    %176 = vmatpush1.bf16.msra.mxu0 0
    %177 = vmatprep.subr.bf16.mxu0 0
    %178 = vmatpush1.bf16.msra.mxu0 0
    %179 = vmatprep.subr.bf16.mxu0 0
    %180 = vmatpush1.bf16.msra.mxu0 0
    %181 = vmatprep.subr.bf16.mxu0 0
    %182 = vmatpush1.bf16.msra.mxu0 0
    %183 = vmatprep.subr.bf16.mxu0 0
    %184 = vmatpush1.bf16.msra.mxu0 0
    %185 = vmatprep.subr.bf16.mxu0 0
    %186 = vmatpush1.bf16.msra.mxu0 0
    %187 = vmatprep.subr.bf16.mxu0 0
    %188 = vmatpush1.bf16.msra.mxu0 0
    %189 = vmatprep.subr.bf16.mxu0 0
    %190 = vmatpush1.bf16.msra.mxu0 0
    %191 = vmatprep.mubr.bf16.mxu0 0
    %192 = vmatmul.mubr.bf16.gmra.mrb[0].mxu0 %v157
    %v193 = vpop.f32.mrb[0].mxu0
    %v194 = vadd.f32 0.0, %v193
    %v195 = vpop.f32.mrb[0].mxu0
    %v196 = vpop.f32.mrb[0].mxu0
    %v197 = vadd.f32 0.0, %v196
    %v198 = vpop.f32.mrb[0].mxu0
    %199 = vdwg.mxu0
    %v201 = vsel %vm111, %v95, 0
    %203 = vmatprep.subr.bf16.mxu0 0
    %204 = vmatpush1.bf16.msra.mxu0 %v109
    %205 = vmatprep.subr.bf16.mxu0 0
    %206 = vmatpush1.bf16.msra.mxu0 0
    %207 = vmatprep.subr.bf16.mxu0 0
    %208 = vmatpush1.bf16.msra.mxu0 0
    %209 = vmatprep.subr.bf16.mxu0 0
    %210 = vmatpush1.bf16.msra.mxu0 0
    %211 = vmatprep.subr.bf16.mxu0 0
    %212 = vmatpush1.bf16.msra.mxu0 0
    %213 = vmatprep.subr.bf16.mxu0 0
    %214 = vmatpush1.bf16.msra.mxu0 0
    %215 = vmatprep.subr.bf16.mxu0 0
    %216 = vmatpush1.bf16.msra.mxu0 0
    %217 = vmatprep.subr.bf16.mxu0 0
    %218 = vmatpush1.bf16.msra.mxu0 0
    %219 = vmatprep.subr.bf16.mxu0 0
    %220 = vmatpush1.bf16.msra.mxu0 0
    %221 = vmatprep.subr.bf16.mxu0 0
    %222 = vmatpush1.bf16.msra.mxu0 0
    %223 = vmatprep.subr.bf16.mxu0 0
    %224 = vmatpush1.bf16.msra.mxu0 0
    %225 = vmatprep.subr.bf16.mxu0 0
    %226 = vmatpush1.bf16.msra.mxu0 0
    %227 = vmatprep.subr.bf16.mxu0 0
    %228 = vmatpush1.bf16.msra.mxu0 0
    %229 = vmatprep.subr.bf16.mxu0 0
    %230 = vmatpush1.bf16.msra.mxu0 0
    %231 = vmatprep.subr.bf16.mxu0 0
    %232 = vmatpush1.bf16.msra.mxu0 0
    %233 = vmatprep.subr.bf16.mxu0 0
    %234 = vmatpush1.bf16.msra.mxu0 0
    %235 = vmatprep.mubr.bf16.mxu0 0
    %236 = vmatmul.mubr.bf16.gmra.mrb[0].mxu0 %v201
    %v237 = vpop.f32.mrb[0].mxu0
    %v238 = vadd.f32 0.0, %v237
    %v239 = vpop.f32.mrb[0].mxu0
    %v240 = vpop.f32.mrb[0].mxu0
    %v241 = vadd.f32 0.0, %v240
    %v242 = vpop.f32.mrb[0].mxu0
    %243 = vdwg.mxu0
    %v245 = vsel %vm111, %v96, 0
    %247 = vmatprep.subr.bf16.mxu0 0
    %248 = vmatpush1.bf16.msra.mxu0 %v109
    %249 = vmatprep.subr.bf16.mxu0 0
    %250 = vmatpush1.bf16.msra.mxu0 0
    %251 = vmatprep.subr.bf16.mxu0 0
    %252 = vmatpush1.bf16.msra.mxu0 0
    %253 = vmatprep.subr.bf16.mxu0 0
    %254 = vmatpush1.bf16.msra.mxu0 0
    %255 = vmatprep.subr.bf16.mxu0 0
    %256 = vmatpush1.bf16.msra.mxu0 0
    %257 = vmatprep.subr.bf16.mxu0 0
    %258 = vmatpush1.bf16.msra.mxu0 0
    %259 = vmatprep.subr.bf16.mxu0 0
    %260 = vmatpush1.bf16.msra.mxu0 0
    %261 = vmatprep.subr.bf16.mxu0 0
    %262 = vmatpush1.bf16.msra.mxu0 0
    %263 = vmatprep.subr.bf16.mxu0 0
    %264 = vmatpush1.bf16.msra.mxu0 0
    %265 = vmatprep.subr.bf16.mxu0 0
    %266 = vmatpush1.bf16.msra.mxu0 0
    %267 = vmatprep.subr.bf16.mxu0 0
    %268 = vmatpush1.bf16.msra.mxu0 0
    %269 = vmatprep.subr.bf16.mxu0 0
    %270 = vmatpush1.bf16.msra.mxu0 0
    %271 = vmatprep.subr.bf16.mxu0 0
    %272 = vmatpush1.bf16.msra.mxu0 0
    %273 = vmatprep.subr.bf16.mxu0 0
    %274 = vmatpush1.bf16.msra.mxu0 0
    %275 = vmatprep.subr.bf16.mxu0 0
    %276 = vmatpush1.bf16.msra.mxu0 0
    %277 = vmatprep.subr.bf16.mxu0 0
    %278 = vmatpush1.bf16.msra.mxu0 0
    %279 = vmatprep.mubr.bf16.mxu0 0
    %280 = vmatmul.mubr.bf16.gmra.mrb[0].mxu0 %v245
    %v281 = vpop.f32.mrb[0].mxu0
    %v282 = vadd.f32 0.0, %v281
    %v283 = vpop.f32.mrb[0].mxu0
    %v284 = vpop.f32.mrb[0].mxu0
    %v285 = vadd.f32 0.0, %v284
    %v286 = vpop.f32.mrb[0].mxu0
    %287 = vdwg.mxu0
    %v289 = vsel %vm111, %v97, 0
    %291 = vmatprep.subr.bf16.mxu0 0
    %292 = vmatpush1.bf16.msra.mxu0 %v109
    %293 = vmatprep.subr.bf16.mxu0 0
    %294 = vmatpush1.bf16.msra.mxu0 0
    %295 = vmatprep.subr.bf16.mxu0 0
    %296 = vmatpush1.bf16.msra.mxu0 0
    %297 = vmatprep.subr.bf16.mxu0 0
    %298 = vmatpush1.bf16.msra.mxu0 0
    %299 = vmatprep.subr.bf16.mxu0 0
    %300 = vmatpush1.bf16.msra.mxu0 0
    %301 = vmatprep.subr.bf16.mxu0 0
    %302 = vmatpush1.bf16.msra.mxu0 0
    %303 = vmatprep.subr.bf16.mxu0 0
    %304 = vmatpush1.bf16.msra.mxu0 0
    %305 = vmatprep.subr.bf16.mxu0 0
    %306 = vmatpush1.bf16.msra.mxu0 0
    %307 = vmatprep.subr.bf16.mxu0 0
    %308 = vmatpush1.bf16.msra.mxu0 0
    %309 = vmatprep.subr.bf16.mxu0 0
    %310 = vmatpush1.bf16.msra.mxu0 0
    %311 = vmatprep.subr.bf16.mxu0 0
    %312 = vmatpush1.bf16.msra.mxu0 0
    %313 = vmatprep.subr.bf16.mxu0 0
    %314 = vmatpush1.bf16.msra.mxu0 0
    %315 = vmatprep.subr.bf16.mxu0 0
    %316 = vmatpush1.bf16.msra.mxu0 0
    %317 = vmatprep.subr.bf16.mxu0 0
    %318 = vmatpush1.bf16.msra.mxu0 0
    %319 = vmatprep.subr.bf16.mxu0 0
    %320 = vmatpush1.bf16.msra.mxu0 0
    %321 = vmatprep.subr.bf16.mxu0 0
    %322 = vmatpush1.bf16.msra.mxu0 0
    %323 = vmatprep.mubr.bf16.mxu0 0
    %324 = vmatmul.mubr.bf16.gmra.mrb[0].mxu0 %v289
    %v325 = vpop.f32.mrb[0].mxu0
    %v326 = vadd.f32 0.0, %v325
    %v327 = vpop.f32.mrb[0].mxu0
    %v328 = vpop.f32.mrb[0].mxu0
    %v329 = vadd.f32 0.0, %v328
    %v330 = vpop.f32.mrb[0].mxu0
    %331 = vdwg.mxu0
    %v333 = vsel %vm111, %v98, 0
    %335 = vmatprep.subr.bf16.mxu0 0
    %336 = vmatpush1.bf16.msra.mxu0 %v109
    %337 = vmatprep.subr.bf16.mxu0 0
    %338 = vmatpush1.bf16.msra.mxu0 0
    %339 = vmatprep.subr.bf16.mxu0 0
    %340 = vmatpush1.bf16.msra.mxu0 0
    %341 = vmatprep.subr.bf16.mxu0 0
    %342 = vmatpush1.bf16.msra.mxu0 0
    %343 = vmatprep.subr.bf16.mxu0 0
    %344 = vmatpush1.bf16.msra.mxu0 0
    %345 = vmatprep.subr.bf16.mxu0 0
    %346 = vmatpush1.bf16.msra.mxu0 0
    %347 = vmatprep.subr.bf16.mxu0 0
    %348 = vmatpush1.bf16.msra.mxu0 0
    %349 = vmatprep.subr.bf16.mxu0 0
    %350 = vmatpush1.bf16.msra.mxu0 0
    %351 = vmatprep.subr.bf16.mxu0 0
    %352 = vmatpush1.bf16.msra.mxu0 0
    %353 = vmatprep.subr.bf16.mxu0 0
    %354 = vmatpush1.bf16.msra.mxu0 0
    %355 = vmatprep.subr.bf16.mxu0 0
    %356 = vmatpush1.bf16.msra.mxu0 0
    %357 = vmatprep.subr.bf16.mxu0 0
    %358 = vmatpush1.bf16.msra.mxu0 0
    %359 = vmatprep.subr.bf16.mxu0 0
    %360 = vmatpush1.bf16.msra.mxu0 0
    %361 = vmatprep.subr.bf16.mxu0 0
    %362 = vmatpush1.bf16.msra.mxu0 0
    %363 = vmatprep.subr.bf16.mxu0 0
    %364 = vmatpush1.bf16.msra.mxu0 0
    %365 = vmatprep.subr.bf16.mxu0 0
    %366 = vmatpush1.bf16.msra.mxu0 0
    %367 = vmatprep.mubr.bf16.mxu0 0
    %368 = vmatmul.mubr.bf16.gmra.mrb[0].mxu0 %v333
    %v369 = vpop.f32.mrb[0].mxu0
    %v370 = vadd.f32 0.0, %v369
    %v371 = vpop.f32.mrb[0].mxu0
    %v372 = vpop.f32.mrb[0].mxu0
    %v373 = vadd.f32 0.0, %v372
    %v374 = vpop.f32.mrb[0].mxu0
    %375 = vdwg.mxu0
    %v377 = vsel %vm111, %v99, 0
    %379 = vmatprep.subr.bf16.mxu0 0
    %380 = vmatpush1.bf16.msra.mxu0 %v109
    %381 = vmatprep.subr.bf16.mxu0 0
    %382 = vmatpush1.bf16.msra.mxu0 0
    %383 = vmatprep.subr.bf16.mxu0 0
    %384 = vmatpush1.bf16.msra.mxu0 0
    %385 = vmatprep.subr.bf16.mxu0 0
    %386 = vmatpush1.bf16.msra.mxu0 0
    %387 = vmatprep.subr.bf16.mxu0 0
    %388 = vmatpush1.bf16.msra.mxu0 0
    %389 = vmatprep.subr.bf16.mxu0 0
    %390 = vmatpush1.bf16.msra.mxu0 0
    %391 = vmatprep.subr.bf16.mxu0 0
    %392 = vmatpush1.bf16.msra.mxu0 0
    %393 = vmatprep.subr.bf16.mxu0 0
    %394 = vmatpush1.bf16.msra.mxu0 0
    %395 = vmatprep.subr.bf16.mxu0 0
    %396 = vmatpush1.bf16.msra.mxu0 0
    %397 = vmatprep.subr.bf16.mxu0 0
    %398 = vmatpush1.bf16.msra.mxu0 0
    %399 = vmatprep.subr.bf16.mxu0 0
    %400 = vmatpush1.bf16.msra.mxu0 0
    %401 = vmatprep.subr.bf16.mxu0 0
    %402 = vmatpush1.bf16.msra.mxu0 0
    %403 = vmatprep.subr.bf16.mxu0 0
    %404 = vmatpush1.bf16.msra.mxu0 0
    %405 = vmatprep.subr.bf16.mxu0 0
    %406 = vmatpush1.bf16.msra.mxu0 0
    %407 = vmatprep.subr.bf16.mxu0 0
    %408 = vmatpush1.bf16.msra.mxu0 0
    %409 = vmatprep.subr.bf16.mxu0 0
    %410 = vmatpush1.bf16.msra.mxu0 0
    %411 = vmatprep.mubr.bf16.mxu0 0
    %412 = vmatmul.mubr.bf16.gmra.mrb[0].mxu0 %v377
    %v413 = vpop.f32.mrb[0].mxu0
    %v414 = vadd.f32 0.0, %v413
    %v415 = vpop.f32.mrb[0].mxu0
    %v416 = vpop.f32.mrb[0].mxu0
    %v417 = vadd.f32 0.0, %v416
    %v418 = vpop.f32.mrb[0].mxu0
    %419 = vdwg.mxu0
    %v421 = vsel %vm111, %v100, 0
    %423 = vmatprep.subr.bf16.mxu0 0
    %424 = vmatpush1.bf16.msra.mxu0 %v109
    %425 = vmatprep.subr.bf16.mxu0 0
    %426 = vmatpush1.bf16.msra.mxu0 0
    %427 = vmatprep.subr.bf16.mxu0 0
    %428 = vmatpush1.bf16.msra.mxu0 0
    %429 = vmatprep.subr.bf16.mxu0 0
    %430 = vmatpush1.bf16.msra.mxu0 0
    %431 = vmatprep.subr.bf16.mxu0 0
    %432 = vmatpush1.bf16.msra.mxu0 0
    %433 = vmatprep.subr.bf16.mxu0 0
    %434 = vmatpush1.bf16.msra.mxu0 0
    %435 = vmatprep.subr.bf16.mxu0 0
    %436 = vmatpush1.bf16.msra.mxu0 0
    %437 = vmatprep.subr.bf16.mxu0 0
    %438 = vmatpush1.bf16.msra.mxu0 0
    %439 = vmatprep.subr.bf16.mxu0 0
    %440 = vmatpush1.bf16.msra.mxu0 0
    %441 = vmatprep.subr.bf16.mxu0 0
    %442 = vmatpush1.bf16.msra.mxu0 0
    %443 = vmatprep.subr.bf16.mxu0 0
    %444 = vmatpush1.bf16.msra.mxu0 0
    %445 = vmatprep.subr.bf16.mxu0 0
    %446 = vmatpush1.bf16.msra.mxu0 0
    %447 = vmatprep.subr.bf16.mxu0 0
    %448 = vmatpush1.bf16.msra.mxu0 0
    %449 = vmatprep.subr.bf16.mxu0 0
    %450 = vmatpush1.bf16.msra.mxu0 0
    %451 = vmatprep.subr.bf16.mxu0 0
    %452 = vmatpush1.bf16.msra.mxu0 0
    %453 = vmatprep.subr.bf16.mxu0 0
    %454 = vmatpush1.bf16.msra.mxu0 0
    %455 = vmatprep.mubr.bf16.mxu0 0
    %456 = vmatmul.mubr.bf16.gmra.mrb[0].mxu0 %v421
    %v457 = vpop.f32.mrb[0].mxu0
    %v458 = vadd.f32 0.0, %v457
    %v459 = vpop.f32.mrb[0].mxu0
    %v460 = vpop.f32.mrb[0].mxu0
    %v461 = vadd.f32 0.0, %v460
    %v462 = vpop.f32.mrb[0].mxu0
    %463 = vdwg.mxu0
    %v464 = vpack.c.bf16 %v153, %v150
    %v465 = vpack.c.bf16 %v197, %v194
    %v466 = vpack.c.bf16 %v241, %v238
    %v467 = vpack.c.bf16 %v285, %v282
    %v468 = vpack.c.bf16 %v329, %v326
    %v469 = vpack.c.bf16 %v373, %v370
    %v470 = vpack.c.bf16 %v417, %v414
    %v471 = vpack.c.bf16 %v461, %v458
    %v474 = vunpack.c.l.b16 %v103
    %v475 = vunpack.c.l.b16 %v104
    %v476 = vpack.c.b16 %v475, %v474
    %v478 = vsel %vm111, %v476, 0
    %480 = vmatprep.subr.bf16.mxu0 0
    %481 = vmatpush1.bf16.msra.mxu0 %v464
    %482 = vmatprep.subr.bf16.mxu0 0
    %483 = vmatpush1.bf16.msra.mxu0 0
    %484 = vmatprep.subr.bf16.mxu0 0
    %485 = vmatpush1.bf16.msra.mxu0 0
    %486 = vmatprep.subr.bf16.mxu0 0
    %487 = vmatpush1.bf16.msra.mxu0 0
    %488 = vmatprep.subr.bf16.mxu0 0
    %489 = vmatpush1.bf16.msra.mxu0 0
    %490 = vmatprep.subr.bf16.mxu0 0
    %491 = vmatpush1.bf16.msra.mxu0 0
    %492 = vmatprep.subr.bf16.mxu0 0
    %493 = vmatpush1.bf16.msra.mxu0 0
    %494 = vmatprep.subr.bf16.mxu0 0
    %495 = vmatpush1.bf16.msra.mxu0 0
    %496 = vmatprep.subr.bf16.mxu0 0
    %497 = vmatpush1.bf16.msra.mxu0 0
    %498 = vmatprep.subr.bf16.mxu0 0
    %499 = vmatpush1.bf16.msra.mxu0 0
    %500 = vmatprep.subr.bf16.mxu0 0
    %501 = vmatpush1.bf16.msra.mxu0 0
    %502 = vmatprep.subr.bf16.mxu0 0
    %503 = vmatpush1.bf16.msra.mxu0 0
    %504 = vmatprep.subr.bf16.mxu0 0
    %505 = vmatpush1.bf16.msra.mxu0 0
    %506 = vmatprep.subr.bf16.mxu0 0
    %507 = vmatpush1.bf16.msra.mxu0 0
    %508 = vmatprep.subr.bf16.mxu0 0
    %509 = vmatpush1.bf16.msra.mxu0 0
    %510 = vmatprep.subr.bf16.mxu0 0
    %511 = vmatpush1.bf16.msra.mxu0 0
    %512 = vmatprep.mubr.bf16.mxu0 0
    %513 = vmatmul.mubr.bf16.gmra.mrb[0].mxu0 %v478
    %v514 = vpop.f32.mrb[0].mxu0
    %v515 = vadd.f32 0.0, %v514
    %v516 = vpop.f32.mrb[0].mxu0
    %v517 = vpop.f32.mrb[0].mxu0
    %v518 = vadd.f32 0.0, %v517
    %v519 = vpop.f32.mrb[0].mxu0
    %520 = vdwg.mxu0
    %521 = vmatprep.subr.bf16.mxu0 0
    %522 = vmatpush1.bf16.msra.mxu0 %v465
    %523 = vmatprep.subr.bf16.mxu0 0
    %524 = vmatpush1.bf16.msra.mxu0 0
    %525 = vmatprep.subr.bf16.mxu0 0
    %526 = vmatpush1.bf16.msra.mxu0 0
    %527 = vmatprep.subr.bf16.mxu0 0
    %528 = vmatpush1.bf16.msra.mxu0 0
    %529 = vmatprep.subr.bf16.mxu0 0
    %530 = vmatpush1.bf16.msra.mxu0 0
    %531 = vmatprep.subr.bf16.mxu0 0
    %532 = vmatpush1.bf16.msra.mxu0 0
    %533 = vmatprep.subr.bf16.mxu0 0
    %534 = vmatpush1.bf16.msra.mxu0 0
    %535 = vmatprep.subr.bf16.mxu0 0
    %536 = vmatpush1.bf16.msra.mxu0 0
    %537 = vmatprep.subr.bf16.mxu0 0
    %538 = vmatpush1.bf16.msra.mxu0 0
    %539 = vmatprep.subr.bf16.mxu0 0
    %540 = vmatpush1.bf16.msra.mxu0 0
    %541 = vmatprep.subr.bf16.mxu0 0
    %542 = vmatpush1.bf16.msra.mxu0 0
    %543 = vmatprep.subr.bf16.mxu0 0
    %544 = vmatpush1.bf16.msra.mxu0 0
    %545 = vmatprep.subr.bf16.mxu0 0
    %546 = vmatpush1.bf16.msra.mxu0 0
    %547 = vmatprep.subr.bf16.mxu0 0
    %548 = vmatpush1.bf16.msra.mxu0 0
    %549 = vmatprep.subr.bf16.mxu0 0
    %550 = vmatpush1.bf16.msra.mxu0 0
    %551 = vmatprep.subr.bf16.mxu0 0
    %552 = vmatpush1.bf16.msra.mxu0 0
    %553 = vmatprep.mubr.bf16.mxu0 0
    %554 = vmatmul.mubr.bf16.gmra.mrb[0].mxu0 %v478
    %v555 = vpop.f32.mrb[0].mxu0
    %v556 = vadd.f32 0.0, %v555
    %v557 = vpop.f32.mrb[0].mxu0
    %v558 = vpop.f32.mrb[0].mxu0
    %v559 = vadd.f32 0.0, %v558
    %v560 = vpop.f32.mrb[0].mxu0
    %561 = vdwg.mxu0
    %562 = vmatprep.subr.bf16.mxu0 0
    %563 = vmatpush1.bf16.msra.mxu0 %v466
    %564 = vmatprep.subr.bf16.mxu0 0
    %565 = vmatpush1.bf16.msra.mxu0 0
    %566 = vmatprep.subr.bf16.mxu0 0
    %567 = vmatpush1.bf16.msra.mxu0 0
    %568 = vmatprep.subr.bf16.mxu0 0
    %569 = vmatpush1.bf16.msra.mxu0 0
    %570 = vmatprep.subr.bf16.mxu0 0
    %571 = vmatpush1.bf16.msra.mxu0 0
    %572 = vmatprep.subr.bf16.mxu0 0
    %573 = vmatpush1.bf16.msra.mxu0 0
    %574 = vmatprep.subr.bf16.mxu0 0
    %575 = vmatpush1.bf16.msra.mxu0 0
    %576 = vmatprep.subr.bf16.mxu0 0
    %577 = vmatpush1.bf16.msra.mxu0 0
    %578 = vmatprep.subr.bf16.mxu0 0
    %579 = vmatpush1.bf16.msra.mxu0 0
    %580 = vmatprep.subr.bf16.mxu0 0
    %581 = vmatpush1.bf16.msra.mxu0 0
    %582 = vmatprep.subr.bf16.mxu0 0
    %583 = vmatpush1.bf16.msra.mxu0 0
    %584 = vmatprep.subr.bf16.mxu0 0
    %585 = vmatpush1.bf16.msra.mxu0 0
    %586 = vmatprep.subr.bf16.mxu0 0
    %587 = vmatpush1.bf16.msra.mxu0 0
    %588 = vmatprep.subr.bf16.mxu0 0
    %589 = vmatpush1.bf16.msra.mxu0 0
    %590 = vmatprep.subr.bf16.mxu0 0
    %591 = vmatpush1.bf16.msra.mxu0 0
    %592 = vmatprep.subr.bf16.mxu0 0
    %593 = vmatpush1.bf16.msra.mxu0 0
    %594 = vmatprep.mubr.bf16.mxu0 0
    %595 = vmatmul.mubr.bf16.gmra.mrb[0].mxu0 %v478
    %v596 = vpop.f32.mrb[0].mxu0
    %v597 = vadd.f32 0.0, %v596
    %v598 = vpop.f32.mrb[0].mxu0
    %v599 = vpop.f32.mrb[0].mxu0
    %v600 = vadd.f32 0.0, %v599
    %v601 = vpop.f32.mrb[0].mxu0
    %602 = vdwg.mxu0
    %603 = vmatprep.subr.bf16.mxu0 0
    %604 = vmatpush1.bf16.msra.mxu0 %v467
    %605 = vmatprep.subr.bf16.mxu0 0
    %606 = vmatpush1.bf16.msra.mxu0 0
    %607 = vmatprep.subr.bf16.mxu0 0
    %608 = vmatpush1.bf16.msra.mxu0 0
    %609 = vmatprep.subr.bf16.mxu0 0
    %610 = vmatpush1.bf16.msra.mxu0 0
    %611 = vmatprep.subr.bf16.mxu0 0
    %612 = vmatpush1.bf16.msra.mxu0 0
    %613 = vmatprep.subr.bf16.mxu0 0
    %614 = vmatpush1.bf16.msra.mxu0 0
    %615 = vmatprep.subr.bf16.mxu0 0
    %616 = vmatpush1.bf16.msra.mxu0 0
    %617 = vmatprep.subr.bf16.mxu0 0
    %618 = vmatpush1.bf16.msra.mxu0 0
    %619 = vmatprep.subr.bf16.mxu0 0
    %620 = vmatpush1.bf16.msra.mxu0 0
    %621 = vmatprep.subr.bf16.mxu0 0
    %622 = vmatpush1.bf16.msra.mxu0 0
    %623 = vmatprep.subr.bf16.mxu0 0
    %624 = vmatpush1.bf16.msra.mxu0 0
    %625 = vmatprep.subr.bf16.mxu0 0
    %626 = vmatpush1.bf16.msra.mxu0 0
    %627 = vmatprep.subr.bf16.mxu0 0
    %628 = vmatpush1.bf16.msra.mxu0 0
    %629 = vmatprep.subr.bf16.mxu0 0
    %630 = vmatpush1.bf16.msra.mxu0 0
    %631 = vmatprep.subr.bf16.mxu0 0
    %632 = vmatpush1.bf16.msra.mxu0 0
    %633 = vmatprep.subr.bf16.mxu0 0
    %634 = vmatpush1.bf16.msra.mxu0 0
    %635 = vmatprep.mubr.bf16.mxu0 0
    %636 = vmatmul.mubr.bf16.gmra.mrb[0].mxu0 %v478
    %v637 = vpop.f32.mrb[0].mxu0
    %v638 = vadd.f32 0.0, %v637
    %v639 = vpop.f32.mrb[0].mxu0
    %v640 = vpop.f32.mrb[0].mxu0
    %v641 = vadd.f32 0.0, %v640
    %v642 = vpop.f32.mrb[0].mxu0
    %643 = vdwg.mxu0
    %644 = vmatprep.subr.bf16.mxu0 0
    %645 = vmatpush1.bf16.msra.mxu0 %v468
    %646 = vmatprep.subr.bf16.mxu0 0
    %647 = vmatpush1.bf16.msra.mxu0 0
    %648 = vmatprep.subr.bf16.mxu0 0
    %649 = vmatpush1.bf16.msra.mxu0 0
    %650 = vmatprep.subr.bf16.mxu0 0
    %651 = vmatpush1.bf16.msra.mxu0 0
    %652 = vmatprep.subr.bf16.mxu0 0
    %653 = vmatpush1.bf16.msra.mxu0 0
    %654 = vmatprep.subr.bf16.mxu0 0
    %655 = vmatpush1.bf16.msra.mxu0 0
    %656 = vmatprep.subr.bf16.mxu0 0
    %657 = vmatpush1.bf16.msra.mxu0 0
    %658 = vmatprep.subr.bf16.mxu0 0
    %659 = vmatpush1.bf16.msra.mxu0 0
    %660 = vmatprep.subr.bf16.mxu0 0
    %661 = vmatpush1.bf16.msra.mxu0 0
    %662 = vmatprep.subr.bf16.mxu0 0
    %663 = vmatpush1.bf16.msra.mxu0 0
    %664 = vmatprep.subr.bf16.mxu0 0
    %665 = vmatpush1.bf16.msra.mxu0 0
    %666 = vmatprep.subr.bf16.mxu0 0
    %667 = vmatpush1.bf16.msra.mxu0 0
    %668 = vmatprep.subr.bf16.mxu0 0
    %669 = vmatpush1.bf16.msra.mxu0 0
    %670 = vmatprep.subr.bf16.mxu0 0
    %671 = vmatpush1.bf16.msra.mxu0 0
    %672 = vmatprep.subr.bf16.mxu0 0
    %673 = vmatpush1.bf16.msra.mxu0 0
    %674 = vmatprep.subr.bf16.mxu0 0
    %675 = vmatpush1.bf16.msra.mxu0 0
    %676 = vmatprep.mubr.bf16.mxu0 0
    %677 = vmatmul.mubr.bf16.gmra.mrb[0].mxu0 %v478
    %v678 = vpop.f32.mrb[0].mxu0
    %v679 = vadd.f32 0.0, %v678
    %v680 = vpop.f32.mrb[0].mxu0
    %v681 = vpop.f32.mrb[0].mxu0
    %v682 = vadd.f32 0.0, %v681
    %v683 = vpop.f32.mrb[0].mxu0
    %684 = vdwg.mxu0
    %685 = vmatprep.subr.bf16.mxu0 0
    %686 = vmatpush1.bf16.msra.mxu0 %v469
    %687 = vmatprep.subr.bf16.mxu0 0
    %688 = vmatpush1.bf16.msra.mxu0 0
    %689 = vmatprep.subr.bf16.mxu0 0
    %690 = vmatpush1.bf16.msra.mxu0 0
    %691 = vmatprep.subr.bf16.mxu0 0
    %692 = vmatpush1.bf16.msra.mxu0 0
    %693 = vmatprep.subr.bf16.mxu0 0
    %694 = vmatpush1.bf16.msra.mxu0 0
    %695 = vmatprep.subr.bf16.mxu0 0
    %696 = vmatpush1.bf16.msra.mxu0 0
    %697 = vmatprep.subr.bf16.mxu0 0
    %698 = vmatpush1.bf16.msra.mxu0 0
    %699 = vmatprep.subr.bf16.mxu0 0
    %700 = vmatpush1.bf16.msra.mxu0 0
    %701 = vmatprep.subr.bf16.mxu0 0
    %702 = vmatpush1.bf16.msra.mxu0 0
    %703 = vmatprep.subr.bf16.mxu0 0
    %704 = vmatpush1.bf16.msra.mxu0 0
    %705 = vmatprep.subr.bf16.mxu0 0
    %706 = vmatpush1.bf16.msra.mxu0 0
    %707 = vmatprep.subr.bf16.mxu0 0
    %708 = vmatpush1.bf16.msra.mxu0 0
    %709 = vmatprep.subr.bf16.mxu0 0
    %710 = vmatpush1.bf16.msra.mxu0 0
    %711 = vmatprep.subr.bf16.mxu0 0
    %712 = vmatpush1.bf16.msra.mxu0 0
    %713 = vmatprep.subr.bf16.mxu0 0
    %714 = vmatpush1.bf16.msra.mxu0 0
    %715 = vmatprep.subr.bf16.mxu0 0
    %716 = vmatpush1.bf16.msra.mxu0 0
    %717 = vmatprep.mubr.bf16.mxu0 0
    %718 = vmatmul.mubr.bf16.gmra.mrb[0].mxu0 %v478
    %v719 = vpop.f32.mrb[0].mxu0
    %v720 = vadd.f32 0.0, %v719
    %v721 = vpop.f32.mrb[0].mxu0
    %v722 = vpop.f32.mrb[0].mxu0
    %v723 = vadd.f32 0.0, %v722
    %v724 = vpop.f32.mrb[0].mxu0
    %725 = vdwg.mxu0
    %726 = vmatprep.subr.bf16.mxu0 0
    %727 = vmatpush1.bf16.msra.mxu0 %v470
    %728 = vmatprep.subr.bf16.mxu0 0
    %729 = vmatpush1.bf16.msra.mxu0 0
    %730 = vmatprep.subr.bf16.mxu0 0
    %731 = vmatpush1.bf16.msra.mxu0 0
    %732 = vmatprep.subr.bf16.mxu0 0
    %733 = vmatpush1.bf16.msra.mxu0 0
    %734 = vmatprep.subr.bf16.mxu0 0
    %735 = vmatpush1.bf16.msra.mxu0 0
    %736 = vmatprep.subr.bf16.mxu0 0
    %737 = vmatpush1.bf16.msra.mxu0 0
    %738 = vmatprep.subr.bf16.mxu0 0
    %739 = vmatpush1.bf16.msra.mxu0 0
    %740 = vmatprep.subr.bf16.mxu0 0
    %741 = vmatpush1.bf16.msra.mxu0 0
    %742 = vmatprep.subr.bf16.mxu0 0
    %743 = vmatpush1.bf16.msra.mxu0 0
    %744 = vmatprep.subr.bf16.mxu0 0
    %745 = vmatpush1.bf16.msra.mxu0 0
    %746 = vmatprep.subr.bf16.mxu0 0
    %747 = vmatpush1.bf16.msra.mxu0 0
    %748 = vmatprep.subr.bf16.mxu0 0
    %749 = vmatpush1.bf16.msra.mxu0 0
    %750 = vmatprep.subr.bf16.mxu0 0
    %751 = vmatpush1.bf16.msra.mxu0 0
    %752 = vmatprep.subr.bf16.mxu0 0
    %753 = vmatpush1.bf16.msra.mxu0 0
    %754 = vmatprep.subr.bf16.mxu0 0
    %755 = vmatpush1.bf16.msra.mxu0 0
    %756 = vmatprep.subr.bf16.mxu0 0
    %757 = vmatpush1.bf16.msra.mxu0 0
    %758 = vmatprep.mubr.bf16.mxu0 0
    %759 = vmatmul.mubr.bf16.gmra.mrb[0].mxu0 %v478
    %v760 = vpop.f32.mrb[0].mxu0
    %v761 = vadd.f32 0.0, %v760
    %v762 = vpop.f32.mrb[0].mxu0
    %v763 = vpop.f32.mrb[0].mxu0
    %v764 = vadd.f32 0.0, %v763
    %v765 = vpop.f32.mrb[0].mxu0
    %766 = vdwg.mxu0
    %767 = vmatprep.subr.bf16.mxu0 0
    %768 = vmatpush1.bf16.msra.mxu0 %v471
    %769 = vmatprep.subr.bf16.mxu0 0
    %770 = vmatpush1.bf16.msra.mxu0 0
    %771 = vmatprep.subr.bf16.mxu0 0
    %772 = vmatpush1.bf16.msra.mxu0 0
    %773 = vmatprep.subr.bf16.mxu0 0
    %774 = vmatpush1.bf16.msra.mxu0 0
    %775 = vmatprep.subr.bf16.mxu0 0
    %776 = vmatpush1.bf16.msra.mxu0 0
    %777 = vmatprep.subr.bf16.mxu0 0
    %778 = vmatpush1.bf16.msra.mxu0 0
    %779 = vmatprep.subr.bf16.mxu0 0
    %780 = vmatpush1.bf16.msra.mxu0 0
    %781 = vmatprep.subr.bf16.mxu0 0
    %782 = vmatpush1.bf16.msra.mxu0 0
    %783 = vmatprep.subr.bf16.mxu0 0
    %784 = vmatpush1.bf16.msra.mxu0 0
    %785 = vmatprep.subr.bf16.mxu0 0
    %786 = vmatpush1.bf16.msra.mxu0 0
    %787 = vmatprep.subr.bf16.mxu0 0
    %788 = vmatpush1.bf16.msra.mxu0 0
    %789 = vmatprep.subr.bf16.mxu0 0
    %790 = vmatpush1.bf16.msra.mxu0 0
    %791 = vmatprep.subr.bf16.mxu0 0
    %792 = vmatpush1.bf16.msra.mxu0 0
    %793 = vmatprep.subr.bf16.mxu0 0
    %794 = vmatpush1.bf16.msra.mxu0 0
    %795 = vmatprep.subr.bf16.mxu0 0
    %796 = vmatpush1.bf16.msra.mxu0 0
    %797 = vmatprep.subr.bf16.mxu0 0
    %798 = vmatpush1.bf16.msra.mxu0 0
    %799 = vmatprep.mubr.bf16.mxu0 0
    %800 = vmatmul.mubr.bf16.gmra.mrb[0].mxu0 %v478
    %v801 = vpop.f32.mrb[0].mxu0
    %v802 = vadd.f32 0.0, %v801
    %v803 = vpop.f32.mrb[0].mxu0
    %v804 = vpop.f32.mrb[0].mxu0
    %v805 = vadd.f32 0.0, %v804
    %v806 = vpop.f32.mrb[0].mxu0
    %807 = vdwg.mxu0
    %v808 = vld [vmem:[#allocation7] sm:$0xff]
    %v809 = vld [vmem:[#allocation7 + $0x8] sm:$0xff]
    %v810 = vld [vmem:[#allocation7 + $0x10] sm:$0xff]
    %v811 = vld [vmem:[#allocation7 + $0x18] sm:$0xff]
    %v812 = vld [vmem:[#allocation7 + $0x20] sm:$0xff]
    %v813 = vld [vmem:[#allocation7 + $0x28] sm:$0xff]
    %v814 = vld [vmem:[#allocation7 + $0x30] sm:$0xff]
    %v815 = vld [vmem:[#allocation7 + $0x38] sm:$0xff]
    %v816 = vld [vmem:[#allocation7 + $0x40] sm:$0xff]
    %v817 = vld [vmem:[#allocation7 + $0x48] sm:$0xff]
    %v818 = vld [vmem:[#allocation7 + $0x50] sm:$0xff]
    %v819 = vld [vmem:[#allocation7 + $0x58] sm:$0xff]
    %v820 = vld [vmem:[#allocation7 + $0x60] sm:$0xff]
    %v821 = vld [vmem:[#allocation7 + $0x68] sm:$0xff]
    %v822 = vld [vmem:[#allocation7 + $0x70] sm:$0xff]
    %v823 = vld [vmem:[#allocation7 + $0x78] sm:$0xff]
    %v824 = vld [vmem:[#allocation8] sm:$0xff]
    %v825 = vld [vmem:[#allocation8 + $0x8] sm:$0xff]
    %v826 = vld [vmem:[#allocation8 + $0x10] sm:$0xff]
    %v827 = vld [vmem:[#allocation8 + $0x18] sm:$0xff]
    %v828 = vld [vmem:[#allocation8 + $0x20] sm:$0xff]
    %v829 = vld [vmem:[#allocation8 + $0x28] sm:$0xff]
    %v830 = vld [vmem:[#allocation8 + $0x30] sm:$0xff]
    %v831 = vld [vmem:[#allocation8 + $0x38] sm:$0xff]
    %v832 = vld [vmem:[#allocation8 + $0x40] sm:$0xff]
    %v833 = vld [vmem:[#allocation8 + $0x48] sm:$0xff]
    %v834 = vld [vmem:[#allocation8 + $0x50] sm:$0xff]
    %v835 = vld [vmem:[#allocation8 + $0x58] sm:$0xff]
    %v836 = vld [vmem:[#allocation8 + $0x60] sm:$0xff]
    %v837 = vld [vmem:[#allocation8 + $0x68] sm:$0xff]
    %v838 = vld [vmem:[#allocation8 + $0x70] sm:$0xff]
    %v839 = vld [vmem:[#allocation8 + $0x78] sm:$0xff]
    %v840 = vmul.f32 %v515, 0.0010405828
    %v841 = vmul.f32 %v518, 0.0010405828
    %v842 = vmul.f32 %v556, 0.0010405828
    %v843 = vmul.f32 %v559, 0.0010405828
    %v844 = vmul.f32 %v597, 0.0010405828
    %v845 = vmul.f32 %v600, 0.0010405828
    %v846 = vmul.f32 %v638, 0.0010405828
    %v847 = vmul.f32 %v641, 0.0010405828
    %v848 = vmul.f32 %v679, 0.0010405828
    %v849 = vmul.f32 %v682, 0.0010405828
    %v850 = vmul.f32 %v720, 0.0010405828
    %v851 = vmul.f32 %v723, 0.0010405828
    %v852 = vmul.f32 %v761, 0.0010405828
    %v853 = vmul.f32 %v764, 0.0010405828
    %v854 = vmul.f32 %v802, 0.0010405828
    %v855 = vmul.f32 %v805, 0.0010405828
    %v856 = vsub.f32 %v840, %v824
    %v857 = vsub.f32 %v841, %v825
    %v858 = vsub.f32 %v842, %v826
    %v859 = vsub.f32 %v843, %v827
    %v860 = vsub.f32 %v844, %v828
    %v861 = vsub.f32 %v845, %v829
    %v862 = vsub.f32 %v846, %v830
    %v863 = vsub.f32 %v847, %v831
    %v864 = vsub.f32 %v848, %v832
    %v865 = vsub.f32 %v849, %v833
    %v866 = vsub.f32 %v850, %v834
    %v867 = vsub.f32 %v851, %v835
    %v868 = vsub.f32 %v852, %v836
    %v869 = vsub.f32 %v853, %v837
    %v870 = vsub.f32 %v854, %v838
    %v871 = vsub.f32 %v855, %v839
    %v872 = vand.u32 2147483647, %v856
    %v873 = vand.u32 2147483647, %v857
    %v874 = vand.u32 2147483647, %v858
    %v875 = vand.u32 2147483647, %v859
    %v876 = vand.u32 2147483647, %v860
    %v877 = vand.u32 2147483647, %v861
    %v878 = vand.u32 2147483647, %v862
    %v879 = vand.u32 2147483647, %v863
    %v880 = vand.u32 2147483647, %v864
    %v881 = vand.u32 2147483647, %v865
    %v882 = vand.u32 2147483647, %v866
    %v883 = vand.u32 2147483647, %v867
    %v884 = vand.u32 2147483647, %v868
    %v885 = vand.u32 2147483647, %v869
    %v886 = vand.u32 2147483647, %v870
    %v887 = vand.u32 2147483647, %v871
    %v888 = vmul.f32 %v872, 5.0
    %v889 = vmul.f32 %v873, 5.0
    %v890 = vmul.f32 %v874, 5.0
    %v891 = vmul.f32 %v875, 5.0
    %v892 = vmul.f32 %v876, 5.0
    %v893 = vmul.f32 %v877, 5.0
    %v894 = vmul.f32 %v878, 5.0
    %v895 = vmul.f32 %v879, 5.0
    %v896 = vmul.f32 %v880, 5.0
    %v897 = vmul.f32 %v881, 5.0
    %v898 = vmul.f32 %v882, 5.0
    %v899 = vmul.f32 %v883, 5.0
    %v900 = vmul.f32 %v884, 5.0
    %v901 = vmul.f32 %v885, 5.0
    %v902 = vmul.f32 %v886, 5.0
    %v903 = vmul.f32 %v887, 5.0
    %v904 = vadd.f32 %v888, 1.0
    %v905 = vadd.f32 %v889, 1.0
    %v906 = vadd.f32 %v890, 1.0
    %v907 = vadd.f32 %v891, 1.0
    %v908 = vadd.f32 %v892, 1.0
    %v909 = vadd.f32 %v893, 1.0
    %v910 = vadd.f32 %v894, 1.0
    %v911 = vadd.f32 %v895, 1.0
    %v912 = vadd.f32 %v896, 1.0
    %v913 = vadd.f32 %v897, 1.0
    %v914 = vadd.f32 %v898, 1.0
    %v915 = vadd.f32 %v899, 1.0
    %v916 = vadd.f32 %v900, 1.0
    %v917 = vadd.f32 %v901, 1.0
    %v918 = vadd.f32 %v902, 1.0
    %v919 = vadd.f32 %v903, 1.0
    %v920 = vmul.f32 %v808, %v824
    %v921 = vmul.f32 %v809, %v825
    %v922 = vmul.f32 %v810, %v826
    %v923 = vmul.f32 %v811, %v827
    %v924 = vmul.f32 %v812, %v828
    %v925 = vmul.f32 %v813, %v829
    %v926 = vmul.f32 %v814, %v830
    %v927 = vmul.f32 %v815, %v831
    %v928 = vmul.f32 %v816, %v832
    %v929 = vmul.f32 %v817, %v833
    %v930 = vmul.f32 %v818, %v834
    %v931 = vmul.f32 %v819, %v835
    %v932 = vmul.f32 %v820, %v836
    %v933 = vmul.f32 %v821, %v837
    %v934 = vmul.f32 %v822, %v838
    %v935 = vmul.f32 %v823, %v839
    %v936 = vmul.f32 %v920, %v904
    %v937 = vmul.f32 %v921, %v905
    %v938 = vmul.f32 %v922, %v906
    %v939 = vmul.f32 %v923, %v907
    %v940 = vmul.f32 %v924, %v908
    %v941 = vmul.f32 %v925, %v909
    %v942 = vmul.f32 %v926, %v910
    %v943 = vmul.f32 %v927, %v911
    %v944 = vmul.f32 %v928, %v912
    %v945 = vmul.f32 %v929, %v913
    %v946 = vmul.f32 %v930, %v914
    %v947 = vmul.f32 %v931, %v915
    %v948 = vmul.f32 %v932, %v916
    %v949 = vmul.f32 %v933, %v917
    %v950 = vmul.f32 %v934, %v918
    %v951 = vmul.f32 %v935, %v919
    %v952 = vsel %vm111, %v936, 0.0
    %v953 = vsel %vm111, %v937, 0.0
    %v954 = vadd.f32 %v952, %v953
    %v955 = vsel %vm111, %v938, 0.0
    %v956 = vadd.f32 %v954, %v955
    %v957 = vsel %vm111, %v939, 0.0
    %v958 = vadd.f32 %v956, %v957
    %v959 = vsel %vm111, %v940, 0.0
    %v960 = vadd.f32 %v958, %v959
    %v961 = vsel %vm111, %v941, 0.0
    %v962 = vadd.f32 %v960, %v961
    %v963 = vsel %vm111, %v942, 0.0
    %v964 = vadd.f32 %v962, %v963
    %v965 = vsel %vm111, %v943, 0.0
    %v966 = vadd.f32 %v964, %v965
    %v967 = vsel %vm111, %v944, 0.0
    %v968 = vadd.f32 %v966, %v967
    %v969 = vsel %vm111, %v945, 0.0
    %v970 = vadd.f32 %v968, %v969
    %v971 = vsel %vm111, %v946, 0.0
    %v972 = vadd.f32 %v970, %v971
    %v973 = vsel %vm111, %v947, 0.0
    %v974 = vadd.f32 %v972, %v973
    %v975 = vsel %vm111, %v948, 0.0
    %v976 = vadd.f32 %v974, %v975
    %v977 = vsel %vm111, %v949, 0.0
    %v978 = vadd.f32 %v976, %v977
    %v979 = vsel %vm111, %v950, 0.0
    %v980 = vadd.f32 %v978, %v979
    %v981 = vsel %vm111, %v951, 0.0
    %v982 = vadd.f32 %v980, %v981
    %983 = vadd.xlane.f32.xlu0 %v982
    %v984 = vpop.xlane.xlu0 %983
    %v985 = vrot.slane %v984, 4
    %v986 = vadd.f32 %v984, %v985
    %v987 = vrot.slane %v986, 2
    %v988 = vadd.f32 %v986, %v987
    %v989 = vrot.slane %v988, 1
    %v990 = vadd.f32 %v988, %v989
    %s991 = vtos %v990
    %v992 = vadd.f32 %v808, %v824
    %v993 = vadd.f32 %v809, %v825
    %v994 = vadd.f32 %v810, %v826
    %v995 = vadd.f32 %v811, %v827
    %v996 = vadd.f32 %v812, %v828
    %v997 = vadd.f32 %v813, %v829
    %v998 = vadd.f32 %v814, %v830
    %v999 = vadd.f32 %v815, %v831
    %v1000 = vadd.f32 %v816, %v832
    %v1001 = vadd.f32 %v817, %v833
    %v1002 = vadd.f32 %v818, %v834
    %v1003 = vadd.f32 %v819, %v835
    %v1004 = vadd.f32 %v820, %v836
    %v1005 = vadd.f32 %v821, %v837
    %v1006 = vadd.f32 %v822, %v838
    %v1007 = vadd.f32 %v823, %v839
    %v1008 = vmul.f32 %v904, %v992
    %v1009 = vmul.f32 %v905, %v993
    %v1010 = vmul.f32 %v906, %v994
    %v1011 = vmul.f32 %v907, %v995
    %v1012 = vmul.f32 %v908, %v996
    %v1013 = vmul.f32 %v909, %v997
    %v1014 = vmul.f32 %v910, %v998
    %v1015 = vmul.f32 %v911, %v999
    %v1016 = vmul.f32 %v912, %v1000
    %v1017 = vmul.f32 %v913, %v1001
    %v1018 = vmul.f32 %v914, %v1002
    %v1019 = vmul.f32 %v915, %v1003
    %v1020 = vmul.f32 %v916, %v1004
    %v1021 = vmul.f32 %v917, %v1005
    %v1022 = vmul.f32 %v918, %v1006
    %v1023 = vmul.f32 %v919, %v1007
    %v1024 = vsel %vm111, %v1008, 0.0
    %v1025 = vsel %vm111, %v1009, 0.0
    %v1026 = vadd.f32 %v1024, %v1025
    %v1027 = vsel %vm111, %v1010, 0.0
    %v1028 = vadd.f32 %v1026, %v1027
    %v1029 = vsel %vm111, %v1011, 0.0
    %v1030 = vadd.f32 %v1028, %v1029
    %v1031 = vsel %vm111, %v1012, 0.0
    %v1032 = vadd.f32 %v1030, %v1031
    %v1033 = vsel %vm111, %v1013, 0.0
    %v1034 = vadd.f32 %v1032, %v1033
    %v1035 = vsel %vm111, %v1014, 0.0
    %v1036 = vadd.f32 %v1034, %v1035
    %v1037 = vsel %vm111, %v1015, 0.0
    %v1038 = vadd.f32 %v1036, %v1037
    %v1039 = vsel %vm111, %v1016, 0.0
    %v1040 = vadd.f32 %v1038, %v1039
    %v1041 = vsel %vm111, %v1017, 0.0
    %v1042 = vadd.f32 %v1040, %v1041
    %v1043 = vsel %vm111, %v1018, 0.0
    %v1044 = vadd.f32 %v1042, %v1043
    %v1045 = vsel %vm111, %v1019, 0.0
    %v1046 = vadd.f32 %v1044, %v1045
    %v1047 = vsel %vm111, %v1020, 0.0
    %v1048 = vadd.f32 %v1046, %v1047
    %v1049 = vsel %vm111, %v1021, 0.0
    %v1050 = vadd.f32 %v1048, %v1049
    %v1051 = vsel %vm111, %v1022, 0.0
    %v1052 = vadd.f32 %v1050, %v1051
    %v1053 = vsel %vm111, %v1023, 0.0
    %v1054 = vadd.f32 %v1052, %v1053
    %1055 = vadd.xlane.f32.xlu0 %v1054
    %v1056 = vpop.xlane.xlu0 %1055
    %v1057 = vrot.slane %v1056, 4
    %v1058 = vadd.f32 %v1056, %v1057
    %v1059 = vrot.slane %v1058, 2
    %v1060 = vadd.f32 %v1058, %v1059
    %v1061 = vrot.slane %v1060, 1
    %v1062 = vadd.f32 %v1060, %v1061
    %s1063 = vtos %v1062
    %v1064 = vstv %s991
    %1065 = vst [vmem:[#allocation10] sm:$0xff] %v1064
    %v1066 = vstv %s1063
    %1067 = vst [vmem:[#allocation11] sm:$0xff] %v1066
    // Predicated region
    $region34: #{tpu_custom_call.1} parent=1 // pred_check
      _
    $region35: #{tpu_custom_call.1} parent=1 // pred_check_branch
      %1069 = sbr.rel (0) target = $region37
    $region36: #{tpu_custom_call.1} parent=1 // pred_region
      %s1071 = ssub.s32 128, 128
      %1072 = vsyncadd [#allocation4], %s1071
      %s1074 = sshll.u32 [#allocation10], 4
      %s1075 = int_to_ptr.vmem [resolvable:$true] %s1074
      %1077 = dma.vmem_to_hbm [thread:$0]  %s1075, 128, %s4, [#allocation4]
    $region37: #{tpu_custom_call.1} parent=1 // pred_fallthru
      _
    // Predicated region
    $region38: #{tpu_custom_call.1} parent=1 // pred_check
      _
    $region39: #{tpu_custom_call.1} parent=1 // pred_check_branch
      %1079 = sbr.rel (0) target = $region41
    $region40: #{tpu_custom_call.1} parent=1 // pred_region
      %s1081 = ssub.s32 128, 128
      %1082 = vsyncadd [#allocation12], %s1081
      %s1084 = sshll.u32 [#allocation11], 4
      %s1085 = int_to_ptr.vmem [resolvable:$true] %s1084
      %1087 = dma.vmem_to_hbm [thread:$0]  %s1085, 128, %s5, [#allocation12]
    $region41: #{tpu_custom_call.1} parent=1 // pred_fallthru
      _
    // Predicated region
    $region42: #{tpu_custom_call.1} parent=1 // pred_check
      _
    $region43: #{tpu_custom_call.1} parent=1 // pred_check_branch
      %1089 = sbr.rel (0) target = $region45
    $region44: #{tpu_custom_call.1} parent=1 // pred_region
      %1090 = dma.done [#allocation4], 128
    $region45: #{tpu_custom_call.1} parent=1 // pred_fallthru
      _
    // Predicated region
    $region46: #{tpu_custom_call.1} parent=1 // pred_check
      _
    $region47: #{tpu_custom_call.1} parent=1 // pred_check_branch
      %1092 = sbr.rel (0) target = $region49
    $region48: #{tpu_custom_call.1} parent=1 // pred_region
      %1093 = dma.done [#allocation12], 128
    $region49: #{tpu_custom_call.1} parent=1 // pred_fallthru
      _
    %1094 = vsyncpa [#allocation3], 1
    %1095 = vsyncpa [#allocation6], 1
    %1096 = vsyncpa [#allocation9], 1
    %1097 = vsyncpa [#allocation4], 1
    %1098 = vsyncpa [#allocation12], 1

</llo_original>
